<compile_context>
chip_gen: v7x
topology: tpu7x:2x2x1
jax: 0.10.0
libtpu: 0.0.40
codegen_flags: <defaults>
</compile_context>

<pallas_src>
import functools

import jax
import jax.numpy as jnp
from jax import lax
from jax.experimental import pallas as pl
from jax.experimental.pallas import tpu as pltpu


def _row_pool_kernel(x_ref, o_ref, *, kh, row_w):
    """Vertical (kh) max over each pooling row-group.

    x_ref: (TM, kh * row_w) -- the kh consecutive image rows feeding one output
                               row, laid out back-to-back along the lane dim.
    o_ref: (TM, row_w)      -- elementwise max over the kh sub-rows.
    """
    acc = x_ref[:, pl.ds(0, row_w)]
    for r in range(1, kh):                       # kh is small & static -> unrolled
        acc = jnp.maximum(acc, x_ref[:, pl.ds(r * row_w, row_w)])
    o_ref[...] = acc


def _round_up(v, m):
    return ((v + m - 1) // m) * m


def max_pool2d_pallas(x, kernel_size):
    """Equivalent of F.max_pool2d(x, kernel_size) for NCHW input."""
    if isinstance(kernel_size, (tuple, list)):
        kh, kw = int(kernel_size[0]), int(kernel_size[1])
    else:
        kh = kw = int(kernel_size)

    N, C, H, W = x.shape
    Hout, Wout = H // kh, W // kw
    Wc = Wout * kw                                   # cropped row width

    # Floor (no padding) semantics: drop trailing rows/cols that don't fit.
    if H != Hout * kh or W != Wc:
        x = x[:, :, : Hout * kh, : Wc]

    M = N * C * Hout                                 # number of output rows
    # Free, contiguous reshape -- NO transpose / extra HBM relayout pass.
    xv = x.reshape(M, kh * Wc)

    # Block sizing: ~2 MiB of (VMEM-padded) data per pipeline stage, doubled by
    # Pallas' double buffering => ~4-6 MiB total.  Comfortable on every
    # generation (v5e 16 MiB scoped default, v7x 64 MiB physical VMEM).
    itemsize = x.dtype.itemsize
    in_row_bytes = _round_up(kh * Wc, 128) * itemsize
    out_row_bytes = _round_up(Wc, 128) * itemsize
    tm = (2 * 1024 * 1024) // max(1, in_row_bytes + out_row_bytes)
    tm = max(8, (tm // 8) * 8)                       # keep sublane dim 8-aligned
    tm = min(tm, M)                                  # or use the full extent

    grid = (pl.cdiv(M, tm),)

    kernel = functools.partial(_row_pool_kernel, kh=kh, row_w=Wc)
    hpool = pl.pallas_call(
        kernel,
        out_shape=jax.ShapeDtypeStruct((M, Wc), x.dtype),
        grid=grid,
        in_specs=[pl.BlockSpec((tm, kh * Wc), lambda i: (i, 0))],
        out_specs=pl.BlockSpec((tm, Wc), lambda i: (i, 0)),
        compiler_params=pltpu.CompilerParams(
            dimension_semantics=("parallel",),       # shard grid over v7x's 2 TCs
            vmem_limit_bytes=32 * 1024 * 1024,
        ),
    )(xv)

    # Horizontal (kw) max: cheap second pass over the kh-reduced intermediate
    # (only 1/kh of the input bytes).  An exact in-register lane de-interleave
    # by kw inside the kernel has no bulletproof Mosaic primitive, so it is
    # left to XLA here.
    if kw > 1:
        out = jnp.max(hpool.reshape(M, Wout, kw), axis=-1)
    else:
        out = hpool
    return out.reshape(N, C, Hout, Wout)


class MaxPool:
    """JAX/Pallas counterpart of the PyTorch MaxPool layer (forward only)."""

    def __init__(self, kernel_size):
        self.kernel_size = kernel_size
        # Deterministic "parameters" matching the torch module's attributes.
        self.weights = jnp.zeros((1, 1), dtype=jnp.float32)
        self.activations = jnp.empty((1,), dtype=jnp.float32)

    def forward(self, x):
        # TODO(synk): F.max_pool2d(return_indices=True) also records argmax
        # indices (self.idxs) used only by backward()/max_unpool2d; they do not
        # affect the forward output, so they are not materialized here.
        return max_pool2d_pallas(x, self.kernel_size)


def _reference(x, k):
    kh, kw = (k, k) if isinstance(k, int) else k
    return lax.reduce_window(
        x, -jnp.inf, lax.max,
        window_dimensions=(1, 1, kh, kw),
        window_strides=(1, 1, kh, kw),
        padding="VALID",
    )


if __name__ == "__main__":
    key = jax.random.PRNGKey(0)

    # Primary small example, consistent with the module's typical use.
    x = jax.random.normal(key, (2, 4, 16, 16), dtype=jnp.float32)
    layer = MaxPool(kernel_size=2)
    out = jax.block_until_ready(layer.forward(x))
    assert out.shape == (2, 4, 8, 8), out.shape
    assert out.dtype == x.dtype
    assert jnp.allclose(out, _reference(x, 2)), "Pallas maxpool mismatch (2x2)"

    # Multi-block grid + partial last block + odd H that needs cropping.
    x2 = jax.random.normal(jax.random.PRNGKey(1), (8, 32, 35, 30), jnp.float32)
    out2 = jax.block_until_ready(max_pool2d_pallas(x2, 2))
    assert out2.shape == (8, 32, 17, 15), out2.shape
    assert jnp.allclose(out2, _reference(x2, 2)), "Pallas maxpool mismatch (big)"

    # Non-2 kernel size.
    x3 = jax.random.normal(jax.random.PRNGKey(2), (2, 3, 12, 12), jnp.float32)
    out3 = jax.block_until_ready(max_pool2d_pallas(x3, 3))
    assert out3.shape == (2, 3, 4, 4), out3.shape
    assert jnp.allclose(out3, _reference(x3, 3)), "Pallas maxpool mismatch (3x3)"

    print("KERNEL_OK")
</pallas_src>

<mosaic_0001>
module attributes {stable_mosaic.version = 11 : i64} {
  func.func @_row_pool_kernel(%arg0: i32, %arg1: memref<64x32xf32, #tpu.memory_space<vmem>>, %arg2: memref<64x16xf32, #tpu.memory_space<vmem>>) attributes {dimension_semantics = [#tpu.dimension_semantics<parallel>], iteration_bounds = array<i64: 1>, scalar_prefetch = 0 : i64, scratch_operands = 0 : i64, tpu.core_type = #tpu.core_type<tc>, window_params = [{transform_indices = @transform_0, window_bounds = array<i64: 64, 32>}, {transform_indices = @transform_1, window_bounds = array<i64: 64, 16>}]} {
    %c0 = arith.constant 0 : index
    %c0_0 = arith.constant 0 : index
    %0 = vector.load %arg1[%c0, %c0_0] : memref<64x32xf32, #tpu.memory_space<vmem>>, vector<64x16xf32>
    %c0_1 = arith.constant 0 : index
    %c16 = arith.constant 16 : index
    %1 = vector.load %arg1[%c0_1, %c16] : memref<64x32xf32, #tpu.memory_space<vmem>>, vector<64x16xf32>
    %2 = arith.maximumf %0, %1 : vector<64x16xf32>
    %c0_2 = arith.constant 0 : index
    %c0_3 = arith.constant 0 : index
    %3 = vector.load %arg2[%c0_2, %c0_3] : memref<64x16xf32, #tpu.memory_space<vmem>>, vector<64x16xf32>
    tpu.vector_store %arg2[%c0_2, %c0_3], %2 {strides = array<i32>} : memref<64x16xf32, #tpu.memory_space<vmem>>, vector<64x16xf32>,
    return
  }
  func.func @transform_0(%arg0: i32) -> (i32, i32) {
    %c0_i32 = arith.constant 0 : i32
    %c0_i32_0 = arith.constant 0 : i32
    return %arg0, %c0_i32 : i32, i32
  }
  func.func @transform_1(%arg0: i32) -> (i32, i32) {
    %c0_i32 = arith.constant 0 : i32
    %c0_i32_0 = arith.constant 0 : i32
    return %arg0, %c0_i32 : i32, i32
  }
}

</mosaic_0001>

<llo_original>
// kernel: tpu_custom_call.1
$region0: #{tpu_custom_call.1}
  #allocation0 [shape = 'u32[]', space=smem, size = 0x4, offset = 0x4, fixed_abs, tag = 'smem constant byte address 0x4 - core index']
  #allocation1 [shape = 'u32[144,128]{1,0:T(1,128)}', space=vmem, size = 0x12000, scoped, tag = 'internal scratch']
  %s0 = inlined_call_operand.vmem [shape: f32[64,32], index: 0, kind: input, shape index: {}]
  %s1 = inlined_call_operand.vmem [shape: f32[64,16], index: 1, kind: output, shape index: {}]
  %s2 = sld [smem:[#allocation0]]
  $region14: #{tpu_custom_call.1} parent=0
    _
  %s4 = ssub.s32 1, %s2
  %s5 = scalar_select 0, %s4, %s2
  // Predicated region
  $region2: #{tpu_custom_call.1} parent=0 // pred_check
    _
  $region3: #{tpu_custom_call.1} parent=0 // pred_check_branch
    %7 = sbr.rel (0) target = $region5
  $region4: #{tpu_custom_call.1} parent=0 // pred_region
    _
  $region5: #{tpu_custom_call.1} parent=0 // pred_fallthru
    _
  %v8 = vld [vmem:[%s0] sm:$0xff]
  %v9 = vld [vmem:[%s0 + $0x8] sm:$0xff]
  %v10 = vld [vmem:[%s0 + $0x10] sm:$0xff]
  %v11 = vld [vmem:[%s0 + $0x18] sm:$0xff]
  %v12 = vld [vmem:[%s0 + $0x20] sm:$0xff]
  %v13 = vld [vmem:[%s0 + $0x28] sm:$0xff]
  %v14 = vld [vmem:[%s0 + $0x30] sm:$0xff]
  %v15 = vld [vmem:[%s0 + $0x38] sm:$0xff]
  %24 = vrot.lane.b32.xlu0 %v8, 112
  %v25 = vpop.permute.xlu0 %24
  %26 = vrot.lane.b32.xlu0 %v9, 112
  %v27 = vpop.permute.xlu0 %26
  %28 = vrot.lane.b32.xlu0 %v10, 112
  %v29 = vpop.permute.xlu0 %28
  %30 = vrot.lane.b32.xlu0 %v11, 112
  %v31 = vpop.permute.xlu0 %30
  %32 = vrot.lane.b32.xlu0 %v12, 112
  %v33 = vpop.permute.xlu0 %32
  %34 = vrot.lane.b32.xlu0 %v13, 112
  %v35 = vpop.permute.xlu0 %34
  %36 = vrot.lane.b32.xlu0 %v14, 112
  %v37 = vpop.permute.xlu0 %36
  %38 = vrot.lane.b32.xlu0 %v15, 112
  %v39 = vpop.permute.xlu0 %38
  %v48 = vmax.f32 %v8, %v25
  %v49 = vmax.f32 %v9, %v27
  %v50 = vmax.f32 %v10, %v29
  %v51 = vmax.f32 %v11, %v31
  %v52 = vmax.f32 %v12, %v33
  %v53 = vmax.f32 %v13, %v35
  %v54 = vmax.f32 %v14, %v37
  %v55 = vmax.f32 %v15, %v39
  %vm56 = vcmask 130048
  %57 = vst.msk [vmem:[%s1] sm:$0xff] %vm56, %v48
  %58 = vst.msk [vmem:[%s1 + $0x8] sm:$0xff] %vm56, %v49
  %59 = vst.msk [vmem:[%s1 + $0x10] sm:$0xff] %vm56, %v50
  %60 = vst.msk [vmem:[%s1 + $0x18] sm:$0xff] %vm56, %v51
  %61 = vst.msk [vmem:[%s1 + $0x20] sm:$0xff] %vm56, %v52
  %62 = vst.msk [vmem:[%s1 + $0x28] sm:$0xff] %vm56, %v53
  %63 = vst.msk [vmem:[%s1 + $0x30] sm:$0xff] %vm56, %v54
  %64 = vst.msk [vmem:[%s1 + $0x38] sm:$0xff] %vm56, %v55
  // Predicated region
  $region6: #{tpu_custom_call.1} parent=0 // pred_check
    _
  $region7: #{tpu_custom_call.1} parent=0 // pred_check_branch
    %66 = sbr.rel (0) target = $region9
  $region8: #{tpu_custom_call.1} parent=0 // pred_region
    _
  $region9: #{tpu_custom_call.1} parent=0 // pred_fallthru
    _
  // Predicated region
  $region10: #{tpu_custom_call.1} parent=0 // pred_check
    _
  $region11: #{tpu_custom_call.1} parent=0 // pred_check_branch
    %68 = sbr.rel (0) target = $region13
  $region12: #{tpu_custom_call.1} parent=0 // pred_region
    _
  $region13: #{tpu_custom_call.1} parent=0 // pred_fallthru
    _

</llo_original>
